<compile_context>
chip_gen: v6e
topology: v6e:2x2x1
jax: 0.10.0
libtpu: 0.0.40
codegen_flags: <defaults>
</compile_context>

<pallas_src>
import jax
import jax.numpy as jnp
from jax.experimental import pallas as pl
from jax.experimental.pallas import tpu as pltpu

EMB = 32                 # embedding_dim == hidden_dim
CTX = 8                  # context_size
VOCAB = EMB * CTX        # forward only works when context_size*embedding_dim == vocab_size
H = EMB
G = 4 * H                # gate-vector width (= 128 lanes)
NUM_LAYERS = 3

# Row offsets inside the packed bf16 weight slab (all multiples of the bf16
# sublane tiling of 16).
W0_OFF = 0                        # (VOCAB, 4H) layer-0 input weights, transposed, gate-permuted
W1_OFF = W0_OFF + VOCAB           # (4H, 4H)    layer-1 input weights, transposed, zero-padded rows [H,4H)
W2_OFF = W1_OFF + G               # (4H, 4H)    layer-2 input weights, same padding
B_OFF = W2_OFF + G                # (3, 4H)     combined b_ih + b_hh per layer, gate-permuted
SLAB_ROWS = ((B_OFF + NUM_LAYERS + 15) // 16) * 16    # pad to the bf16 sublane tile


def _lstm_gates_to_h(gates):
    """Zero-state LSTM cell on a full-width gate vector.

    `gates` is (1, 4H) f32 in the *packed* gate order [i | o | g | o]
    (the unused f-slot holds a duplicate of o).  With c_prev = 0:
        h = sigmoid(o) * tanh(sigmoid(i) * tanh(g)).
    sigmoid/tanh run once over the full 128-lane vector (EUP); alignment is
    done with XLU rolls only:
      * tanh(g) -> lanes [0,H) via a 2H roll (direction-agnostic: 2H == -2H mod 4H)
      * sigmoid(o) -> lanes [0,H) via an H roll; blocks 1 and 3 both hold o,
        so either roll direction lands sigmoid(o) at lanes [0,H).
    Returns (1, 4H); lanes [0,H) hold h, remaining lanes hold bounded junk
    (products of sigmoids/tanhs, all in (-1,1)) that downstream zero-padded
    weight rows / masks cancel exactly.
    """
    sig = jax.nn.sigmoid(gates)                      # (1, 4H)
    tnh = jnp.tanh(gates)                            # (1, 4H)
    g_al = pltpu.roll(tnh, shift=2 * H, axis=1)      # lanes [0,H) <- tanh(g)
    tc = jnp.tanh(sig * g_al)                        # lanes [0,H) <- tanh(sigmoid(i)*tanh(g))
    o_al = pltpu.roll(sig, shift=H, axis=1)          # lanes [0,H) <- sigmoid(o) (either direction)
    return o_al * tc                                 # (1, 4H)


def _bard_kernel(tok_ref, emb_ref, w_ref, out_ref):
    # tok_ref: (CTX,)          int32 SMEM  scalar-prefetched token ids
    # emb_ref: (VOCAB, EMB)    f32   VMEM  embedding table
    # w_ref:   (SLAB_ROWS, 4H) bf16  VMEM  packed [W0_T | W1_T(pad) | W2_T(pad) | biases]
    # out_ref: (2, 4H)         f32   VMEM  row 0: log_probs (masked), row 1: h (masked)
    bias = w_ref[B_OFF:B_OFF + NUM_LAYERS, :].astype(jnp.float32)     # (3, 4H)

    # ---- Layer 0: gates0 = concat_k emb[tok_k] @ W0_T + b0, evaluated as eight
    # independent (1, EMB) x (EMB, 4H) bf16 partial dots (no serial pop->add
    # chain) reduced with a balanced tree; bias added last.
    parts = []
    for k in range(CTX):
        e_k = emb_ref[pl.ds(tok_ref[k], 1), :].astype(jnp.bfloat16)   # (1, EMB) bf16 LHS
        w_k = w_ref[W0_OFF + k * EMB:W0_OFF + (k + 1) * EMB, :]       # (EMB, 4H) bf16
        parts.append(jnp.dot(e_k, w_k, preferred_element_type=jnp.float32))
    while len(parts) > 1:
        parts = [parts[i] + parts[i + 1] for i in range(0, len(parts), 2)]
    gates = parts[0] + bias[0:1, :]
    h = _lstm_gates_to_h(gates)                                       # (1, 4H)

    # ---- Layers 1 and 2: h consumed full-width; weight rows [H, 4H) are zero,
    # so the invalid lanes of h contribute exactly 0 to the gates.
    for l, off in ((1, W1_OFF), (2, W2_OFF)):
        gates = jnp.dot(h.astype(jnp.bfloat16), w_ref[off:off + G, :],
                        preferred_element_type=jnp.float32) + bias[l:l + 1, :]
        h = _lstm_gates_to_h(gates)

    # ---- log_softmax over the H valid hidden units, full-width with a lane mask.
    lane = jax.lax.broadcasted_iota(jnp.int32, (1, G), 1)
    valid = lane < H
    hm = jnp.where(valid, h, jnp.float32(-1e30))                      # invalid lanes -> ~-inf
    m = jnp.max(hm, axis=1, keepdims=True)
    s = hm - m
    logp = s - jnp.log(jnp.sum(jnp.exp(s), axis=1, keepdims=True))

    out_ref[0:1, :] = logp                                            # lane-dense (128) stores
    out_ref[1:2, :] = jnp.where(valid, h, jnp.float32(0.0))


@jax.jit
def rubber_bard_lstm_forward(inputs, emb_table, weight_slab):
    """Returns (log_probs (1, H), out (1, 1, H)) like RubberBardLSTM.forward."""
    # VMEM gathers have no bounds check: clamp token ids defensively.
    tok = jnp.clip(inputs.astype(jnp.int32), 0, VOCAB - 1)
    out2 = pl.pallas_call(
        _bard_kernel,
        out_shape=jax.ShapeDtypeStruct((2, G), jnp.float32),
        grid_spec=pltpu.PrefetchScalarGridSpec(
            num_scalar_prefetch=1,     # token ids -> SMEM
            in_specs=[pl.BlockSpec(memory_space=pltpu.MemorySpace.VMEM),
                      pl.BlockSpec(memory_space=pltpu.MemorySpace.VMEM)],
            out_specs=pl.BlockSpec(memory_space=pltpu.MemorySpace.VMEM),
        ),
        cost_estimate=pl.CostEstimate(flops=140_000, transcendentals=1_300,
                                      bytes_accessed=170_000),
    )(tok, emb_table, weight_slab)
    log_probs = out2[0:1, :H]
    out = out2[1:2, :H].reshape(1, 1, H)
    return log_probs, out


def init_params(key):
    """Synthetic parameters matching nn.Embedding / nn.LSTM(vocab, H, 3) shapes.

    LSTM weights are kept pre-transposed: W_ih_l^T (in_features, 4H) and
    W_hh_l^T (H, 4H), PyTorch gate order [i | f | g | o] along the last axis.
    Biases are the combined b_ih + b_hh per layer.
    """
    kk = jax.random.split(key, 13)
    emb_table = jax.random.normal(kk[0], (VOCAB, EMB), jnp.float32)   # Embedding.weight
    bound = 1.0 / (H ** 0.5)                                          # PyTorch LSTM init

    def u(k, shape):
        return jax.random.uniform(k, shape, jnp.float32, -bound, bound)

    w_ih = [u(kk[1], (VOCAB, 4 * H)), u(kk[2], (H, 4 * H)), u(kk[3], (H, 4 * H))]
    w_hh = [u(kk[4 + l], (H, 4 * H)) for l in range(NUM_LAYERS)]      # only sees zero state
    bias = [u(kk[7 + l], (4 * H,)) + u(kk[10 + l], (4 * H,)) for l in range(NUM_LAYERS)]
    return emb_table, w_ih, w_hh, bias


def _permute_gates(w):
    """PyTorch gate order [i|f|g|o] -> kernel order [i|o|g|o] along the last axis.

    The f-gate is provably unused (zero initial cell state), so its slot is
    replaced by a duplicate of the o-gate; this makes the in-kernel o-gate
    alignment roll direction-agnostic.
    """
    i = w[..., 0 * H:1 * H]
    g = w[..., 2 * H:3 * H]
    o = w[..., 3 * H:4 * H]
    return jnp.concatenate([i, o, g, o], axis=-1)


def pack_weight_slab(w_ih, bias):
    """Pack gate-permuted W0_T, zero-padded W1_T/W2_T and the 3 combined biases
    into one bf16 (SLAB_ROWS, 4H) slab -> a single contiguous weight DMA."""
    w0 = _permute_gates(w_ih[0]).astype(jnp.bfloat16)                 # (VOCAB, 4H)

    def pad_layer(w):                                                 # (H,4H) -> (4H,4H)
        wp = _permute_gates(w).astype(jnp.bfloat16)
        return jnp.pad(wp, ((0, G - H), (0, 0)))                      # zero rows [H,4H)

    w1 = pad_layer(w_ih[1])
    w2 = pad_layer(w_ih[2])
    b = jnp.stack([_permute_gates(bb).astype(jnp.bfloat16) for bb in bias])   # (3, 4H)
    slab = jnp.concatenate([w0, w1, w2, b], axis=0)                   # (515, 4H)
    return jnp.pad(slab, ((0, SLAB_ROWS - slab.shape[0]), (0, 0)))


def reference_forward(inputs, emb_table, w_ih, w_hh, bias):
    """Pure-JAX reference: full (unpruned) LSTM math with zero initial state and
    the same bf16 quantization of weights / MXU LHS operands the kernel uses."""
    q = lambda a: a.astype(jnp.bfloat16).astype(jnp.float32)
    x = q(jnp.take(emb_table, inputs, axis=0).reshape(1, -1))         # (1, VOCAB)
    h_in = x
    h_out = None
    for l in range(NUM_LAYERS):
        h_prev = jnp.zeros((1, H), jnp.float32)
        c_prev = jnp.zeros((1, H), jnp.float32)
        gates = h_in @ q(w_ih[l]) + h_prev @ q(w_hh[l]) + q(bias[l])
        i = jax.nn.sigmoid(gates[:, 0 * H:1 * H])
        f = jax.nn.sigmoid(gates[:, 1 * H:2 * H])
        g = jnp.tanh(gates[:, 2 * H:3 * H])
        o = jax.nn.sigmoid(gates[:, 3 * H:4 * H])
        c = f * c_prev + i * g
        h_out = o * jnp.tanh(c)
        h_in = q(h_out)              # kernel feeds a bf16 LHS into the next layer's dot
    log_probs = jax.nn.log_softmax(h_out, axis=1)
    return log_probs, h_out.reshape(1, 1, H)


if __name__ == "__main__":
    key = jax.random.PRNGKey(0)
    pkey, ikey = jax.random.split(key)
    emb_table, w_ih, w_hh, bias = init_params(pkey)
    slab = pack_weight_slab(w_ih, bias)

    # inputs: context_size token indices (the module's `inputs`)
    inputs = jax.random.randint(ikey, (CTX,), 0, VOCAB, dtype=jnp.int32)

    log_probs, out = rubber_bard_lstm_forward(inputs, emb_table, slab)
    jax.block_until_ready((log_probs, out))

    assert log_probs.shape == (1, H)
    assert out.shape == (1, 1, H)
    # log_softmax rows sum to 1 in prob space
    assert bool(jnp.allclose(jnp.sum(jnp.exp(log_probs), axis=1), 1.0, atol=1e-5))

    # Check against the pure-JAX reference (which applies the same intended bf16
    # quantization of weights/LHS operands, isolating kernel-structure correctness).
    ref_logp, ref_out = reference_forward(inputs, emb_table, w_ih, w_hh, bias)
    assert bool(jnp.allclose(log_probs, ref_logp, atol=5e-3)), (
        float(jnp.max(jnp.abs(log_probs - ref_logp))))
    assert bool(jnp.allclose(out, ref_out, atol=5e-3)), (
        float(jnp.max(jnp.abs(out - ref_out))))
    print("KERNEL_OK")
</pallas_src>

<mosaic_0001>
module attributes {stable_mosaic.version = 11 : i64} {
  func.func @_bard_kernel(%arg0: memref<8xi32, #tpu.memory_space<smem>>, %arg1: memref<256x32xf32, #tpu.memory_space<vmem>>, %arg2: memref<528x128xbf16, #tpu.memory_space<vmem>>, %arg3: memref<2x128xf32, #tpu.memory_space<vmem>>) attributes {dimension_semantics = [], scalar_prefetch = 1 : i64, scratch_operands = 0 : i64, tpu.core_type = #tpu.core_type<tc>} {
    %c512 = arith.constant 512 : index
    %c0 = arith.constant 0 : index
    %0 = vector.load %arg2[%c512, %c0] : memref<528x128xbf16, #tpu.memory_space<vmem>>, vector<3x128xbf16>
    %1 = arith.extf %0 : vector<3x128xbf16> to vector<3x128xf32>
    %c0_0 = arith.constant 0 : index
    %2 = memref.load %arg0[%c0_0] : memref<8xi32, #tpu.memory_space<smem>>
    %3 = arith.index_cast %2 : i32 to index
    %c0_1 = arith.constant 0 : index
    %4 = vector.load %arg1[%3, %c0_1] : memref<256x32xf32, #tpu.memory_space<vmem>>, vector<1x32xf32>
    %5 = arith.truncf %4 : vector<1x32xf32> to vector<1x32xbf16>
    %c0_2 = arith.constant 0 : index
    %c0_3 = arith.constant 0 : index
    %6 = vector.load %arg2[%c0_2, %c0_3] : memref<528x128xbf16, #tpu.memory_space<vmem>>, vector<32x128xbf16>
    %cst = arith.constant dense<0.000000e+00> : vector<1x128xf32>
    %7 = tpu.matmul %5, %6, %cst {dimension_numbers = #tpu.dot_dimension_numbers<[1], [0], [0], [1], [0, 0, 1, 1], [], []>} : vector<1x32xbf16>, vector<32x128xbf16>, vector<1x128xf32> -> vector<1x128xf32>
    %c1 = arith.constant 1 : index
    %8 = memref.load %arg0[%c1] : memref<8xi32, #tpu.memory_space<smem>>
    %9 = arith.index_cast %8 : i32 to index
    %c0_4 = arith.constant 0 : index
    %10 = vector.load %arg1[%9, %c0_4] : memref<256x32xf32, #tpu.memory_space<vmem>>, vector<1x32xf32>
    %11 = arith.truncf %10 : vector<1x32xf32> to vector<1x32xbf16>
    %c32 = arith.constant 32 : index
    %c0_5 = arith.constant 0 : index
    %12 = vector.load %arg2[%c32, %c0_5] : memref<528x128xbf16, #tpu.memory_space<vmem>>, vector<32x128xbf16>
    %cst_6 = arith.constant dense<0.000000e+00> : vector<1x128xf32>
    %13 = tpu.matmul %11, %12, %cst_6 {dimension_numbers = #tpu.dot_dimension_numbers<[1], [0], [0], [1], [0, 0, 1, 1], [], []>} : vector<1x32xbf16>, vector<32x128xbf16>, vector<1x128xf32> -> vector<1x128xf32>
    %c2 = arith.constant 2 : index
    %14 = memref.load %arg0[%c2] : memref<8xi32, #tpu.memory_space<smem>>
    %15 = arith.index_cast %14 : i32 to index
    %c0_7 = arith.constant 0 : index
    %16 = vector.load %arg1[%15, %c0_7] : memref<256x32xf32, #tpu.memory_space<vmem>>, vector<1x32xf32>
    %17 = arith.truncf %16 : vector<1x32xf32> to vector<1x32xbf16>
    %c64 = arith.constant 64 : index
    %c0_8 = arith.constant 0 : index
    %18 = vector.load %arg2[%c64, %c0_8] : memref<528x128xbf16, #tpu.memory_space<vmem>>, vector<32x128xbf16>
    %cst_9 = arith.constant dense<0.000000e+00> : vector<1x128xf32>
    %19 = tpu.matmul %17, %18, %cst_9 {dimension_numbers = #tpu.dot_dimension_numbers<[1], [0], [0], [1], [0, 0, 1, 1], [], []>} : vector<1x32xbf16>, vector<32x128xbf16>, vector<1x128xf32> -> vector<1x128xf32>
    %c3 = arith.constant 3 : index
    %20 = memref.load %arg0[%c3] : memref<8xi32, #tpu.memory_space<smem>>
    %21 = arith.index_cast %20 : i32 to index
    %c0_10 = arith.constant 0 : index
    %22 = vector.load %arg1[%21, %c0_10] : memref<256x32xf32, #tpu.memory_space<vmem>>, vector<1x32xf32>
    %23 = arith.truncf %22 : vector<1x32xf32> to vector<1x32xbf16>
    %c96 = arith.constant 96 : index
    %c0_11 = arith.constant 0 : index
    %24 = vector.load %arg2[%c96, %c0_11] : memref<528x128xbf16, #tpu.memory_space<vmem>>, vector<32x128xbf16>
    %cst_12 = arith.constant dense<0.000000e+00> : vector<1x128xf32>
    %25 = tpu.matmul %23, %24, %cst_12 {dimension_numbers = #tpu.dot_dimension_numbers<[1], [0], [0], [1], [0, 0, 1, 1], [], []>} : vector<1x32xbf16>, vector<32x128xbf16>, vector<1x128xf32> -> vector<1x128xf32>
    %c4 = arith.constant 4 : index
    %26 = memref.load %arg0[%c4] : memref<8xi32, #tpu.memory_space<smem>>
    %27 = arith.index_cast %26 : i32 to index
    %c0_13 = arith.constant 0 : index
    %28 = vector.load %arg1[%27, %c0_13] : memref<256x32xf32, #tpu.memory_space<vmem>>, vector<1x32xf32>
    %29 = arith.truncf %28 : vector<1x32xf32> to vector<1x32xbf16>
    %c128 = arith.constant 128 : index
    %c0_14 = arith.constant 0 : index
    %30 = vector.load %arg2[%c128, %c0_14] : memref<528x128xbf16, #tpu.memory_space<vmem>>, vector<32x128xbf16>
    %cst_15 = arith.constant dense<0.000000e+00> : vector<1x128xf32>
    %31 = tpu.matmul %29, %30, %cst_15 {dimension_numbers = #tpu.dot_dimension_numbers<[1], [0], [0], [1], [0, 0, 1, 1], [], []>} : vector<1x32xbf16>, vector<32x128xbf16>, vector<1x128xf32> -> vector<1x128xf32>
    %c5 = arith.constant 5 : index
    %32 = memref.load %arg0[%c5] : memref<8xi32, #tpu.memory_space<smem>>
    %33 = arith.index_cast %32 : i32 to index
    %c0_16 = arith.constant 0 : index
    %34 = vector.load %arg1[%33, %c0_16] : memref<256x32xf32, #tpu.memory_space<vmem>>, vector<1x32xf32>
    %35 = arith.truncf %34 : vector<1x32xf32> to vector<1x32xbf16>
    %c160 = arith.constant 160 : index
    %c0_17 = arith.constant 0 : index
    %36 = vector.load %arg2[%c160, %c0_17] : memref<528x128xbf16, #tpu.memory_space<vmem>>, vector<32x128xbf16>
    %cst_18 = arith.constant dense<0.000000e+00> : vector<1x128xf32>
    %37 = tpu.matmul %35, %36, %cst_18 {dimension_numbers = #tpu.dot_dimension_numbers<[1], [0], [0], [1], [0, 0, 1, 1], [], []>} : vector<1x32xbf16>, vector<32x128xbf16>, vector<1x128xf32> -> vector<1x128xf32>
    %c6 = arith.constant 6 : index
    %38 = memref.load %arg0[%c6] : memref<8xi32, #tpu.memory_space<smem>>
    %39 = arith.index_cast %38 : i32 to index
    %c0_19 = arith.constant 0 : index
    %40 = vector.load %arg1[%39, %c0_19] : memref<256x32xf32, #tpu.memory_space<vmem>>, vector<1x32xf32>
    %41 = arith.truncf %40 : vector<1x32xf32> to vector<1x32xbf16>
    %c192 = arith.constant 192 : index
    %c0_20 = arith.constant 0 : index
    %42 = vector.load %arg2[%c192, %c0_20] : memref<528x128xbf16, #tpu.memory_space<vmem>>, vector<32x128xbf16>
    %cst_21 = arith.constant dense<0.000000e+00> : vector<1x128xf32>
    %43 = tpu.matmul %41, %42, %cst_21 {dimension_numbers = #tpu.dot_dimension_numbers<[1], [0], [0], [1], [0, 0, 1, 1], [], []>} : vector<1x32xbf16>, vector<32x128xbf16>, vector<1x128xf32> -> vector<1x128xf32>
    %c7 = arith.constant 7 : index
    %44 = memref.load %arg0[%c7] : memref<8xi32, #tpu.memory_space<smem>>
    %45 = arith.index_cast %44 : i32 to index
    %c0_22 = arith.constant 0 : index
    %46 = vector.load %arg1[%45, %c0_22] : memref<256x32xf32, #tpu.memory_space<vmem>>, vector<1x32xf32>
    %47 = arith.truncf %46 : vector<1x32xf32> to vector<1x32xbf16>
    %c224 = arith.constant 224 : index
    %c0_23 = arith.constant 0 : index
    %48 = vector.load %arg2[%c224, %c0_23] : memref<528x128xbf16, #tpu.memory_space<vmem>>, vector<32x128xbf16>
    %cst_24 = arith.constant dense<0.000000e+00> : vector<1x128xf32>
    %49 = tpu.matmul %47, %48, %cst_24 {dimension_numbers = #tpu.dot_dimension_numbers<[1], [0], [0], [1], [0, 0, 1, 1], [], []>} : vector<1x32xbf16>, vector<32x128xbf16>, vector<1x128xf32> -> vector<1x128xf32>
    %50 = arith.addf %7, %13 : vector<1x128xf32>
    %51 = arith.addf %19, %25 : vector<1x128xf32>
    %52 = arith.addf %31, %37 : vector<1x128xf32>
    %53 = arith.addf %43, %49 : vector<1x128xf32>
    %54 = arith.addf %50, %51 : vector<1x128xf32>
    %55 = arith.addf %52, %53 : vector<1x128xf32>
    %56 = arith.addf %54, %55 : vector<1x128xf32>
    %57 = vector.extract_strided_slice %1 {offsets = [0, 0], sizes = [1, 128], strides = [1, 1]} : vector<3x128xf32> to vector<1x128xf32>
    %58 = arith.addf %56, %57 : vector<1x128xf32>
    %59 = arith.negf %58 : vector<1x128xf32>
    %60 = math.exp %59 : vector<1x128xf32>
    %cst_25 = arith.constant 1.000000e+00 : f32
    %61 = vector.broadcast %cst_25 : f32 to vector<1x128xf32>
    %62 = arith.addf %61, %60 : vector<1x128xf32>
    %63 = arith.divf %61, %62 : vector<1x128xf32>
    %64 = math.tanh %58 : vector<1x128xf32>
    %c64_i32 = arith.constant 64 : i32
    %65 = tpu.dynamic_rotate %64 by %c64_i32 dim 1 : vector<1x128xf32>, i32 -> vector<1x128xf32>
    %66 = arith.mulf %63, %65 : vector<1x128xf32>
    %67 = math.tanh %66 : vector<1x128xf32>
    %c32_i32 = arith.constant 32 : i32
    %68 = tpu.dynamic_rotate %63 by %c32_i32 dim 1 : vector<1x128xf32>, i32 -> vector<1x128xf32>
    %69 = arith.mulf %68, %67 : vector<1x128xf32>
    %70 = arith.truncf %69 : vector<1x128xf32> to vector<1x128xbf16>
    %c256 = arith.constant 256 : index
    %c0_26 = arith.constant 0 : index
    %71 = vector.load %arg2[%c256, %c0_26] : memref<528x128xbf16, #tpu.memory_space<vmem>>, vector<128x128xbf16>
    %cst_27 = arith.constant dense<0.000000e+00> : vector<1x128xf32>
    %72 = tpu.matmul %70, %71, %cst_27 {dimension_numbers = #tpu.dot_dimension_numbers<[1], [0], [0], [1], [0, 0, 1, 1], [], []>} : vector<1x128xbf16>, vector<128x128xbf16>, vector<1x128xf32> -> vector<1x128xf32>
    %73 = vector.extract_strided_slice %1 {offsets = [1, 0], sizes = [1, 128], strides = [1, 1]} : vector<3x128xf32> to vector<1x128xf32>
    %74 = arith.addf %72, %73 : vector<1x128xf32>
    %75 = arith.negf %74 : vector<1x128xf32>
    %76 = math.exp %75 : vector<1x128xf32>
    %cst_28 = arith.constant 1.000000e+00 : f32
    %77 = vector.broadcast %cst_28 : f32 to vector<1x128xf32>
    %78 = arith.addf %77, %76 : vector<1x128xf32>
    %79 = arith.divf %77, %78 : vector<1x128xf32>
    %80 = math.tanh %74 : vector<1x128xf32>
    %c64_i32_29 = arith.constant 64 : i32
    %81 = tpu.dynamic_rotate %80 by %c64_i32_29 dim 1 : vector<1x128xf32>, i32 -> vector<1x128xf32>
    %82 = arith.mulf %79, %81 : vector<1x128xf32>
    %83 = math.tanh %82 : vector<1x128xf32>
    %c32_i32_30 = arith.constant 32 : i32
    %84 = tpu.dynamic_rotate %79 by %c32_i32_30 dim 1 : vector<1x128xf32>, i32 -> vector<1x128xf32>
    %85 = arith.mulf %84, %83 : vector<1x128xf32>
    %86 = arith.truncf %85 : vector<1x128xf32> to vector<1x128xbf16>
    %c384 = arith.constant 384 : index
    %c0_31 = arith.constant 0 : index
    %87 = vector.load %arg2[%c384, %c0_31] : memref<528x128xbf16, #tpu.memory_space<vmem>>, vector<128x128xbf16>
    %cst_32 = arith.constant dense<0.000000e+00> : vector<1x128xf32>
    %88 = tpu.matmul %86, %87, %cst_32 {dimension_numbers = #tpu.dot_dimension_numbers<[1], [0], [0], [1], [0, 0, 1, 1], [], []>} : vector<1x128xbf16>, vector<128x128xbf16>, vector<1x128xf32> -> vector<1x128xf32>
    %89 = vector.extract_strided_slice %1 {offsets = [2, 0], sizes = [1, 128], strides = [1, 1]} : vector<3x128xf32> to vector<1x128xf32>
    %90 = arith.addf %88, %89 : vector<1x128xf32>
    %91 = arith.negf %90 : vector<1x128xf32>
    %92 = math.exp %91 : vector<1x128xf32>
    %cst_33 = arith.constant 1.000000e+00 : f32
    %93 = vector.broadcast %cst_33 : f32 to vector<1x128xf32>
    %94 = arith.addf %93, %92 : vector<1x128xf32>
    %95 = arith.divf %93, %94 : vector<1x128xf32>
    %96 = math.tanh %90 : vector<1x128xf32>
    %c64_i32_34 = arith.constant 64 : i32
    %97 = tpu.dynamic_rotate %96 by %c64_i32_34 dim 1 : vector<1x128xf32>, i32 -> vector<1x128xf32>
    %98 = arith.mulf %95, %97 : vector<1x128xf32>
    %99 = math.tanh %98 : vector<1x128xf32>
    %c32_i32_35 = arith.constant 32 : i32
    %100 = tpu.dynamic_rotate %95 by %c32_i32_35 dim 1 : vector<1x128xf32>, i32 -> vector<1x128xf32>
    %101 = arith.mulf %100, %99 : vector<1x128xf32>
    %102 = tpu.iota {dimensions = array<i32: 1>} : vector<1x128xi32>
    %c32_i32_36 = arith.constant 32 : i32
    %103 = vector.broadcast %c32_i32_36 : i32 to vector<1x128xi32>
    %104 = arith.cmpi slt, %102, %103 : vector<1x128xi32>
    %cst_37 = arith.constant -1.000000e+30 : f32
    %105 = vector.broadcast %cst_37 : f32 to vector<1x128xf32>
    %106 = arith.select %104, %101, %105 : vector<1x128xi1>, vector<1x128xf32>
    %cst_38 = arith.constant dense<0xFF800000> : vector<1xf32>
    %107 = vector.multi_reduction <maximumf>, %106, %cst_38 [1] : vector<1x128xf32> to vector<1xf32>
    %108 = vector.shape_cast %107 : vector<1xf32> to vector<1x1xf32>
    %109 = vector.broadcast %108 : vector<1x1xf32> to vector<1x128xf32>
    %110 = arith.subf %106, %109 : vector<1x128xf32>
    %111 = math.exp %110 : vector<1x128xf32>
    %cst_39 = arith.constant dense<0.000000e+00> : vector<1xf32>
    %112 = vector.multi_reduction <add>, %111, %cst_39 [1] : vector<1x128xf32> to vector<1xf32>
    %113 = vector.shape_cast %112 : vector<1xf32> to vector<1x1xf32>
    %114 = math.log %113 : vector<1x1xf32>
    %115 = vector.broadcast %114 : vector<1x1xf32> to vector<1x128xf32>
    %116 = arith.subf %110, %115 : vector<1x128xf32>
    %c0_40 = arith.constant 0 : index
    %c0_41 = arith.constant 0 : index
    %117 = vector.load %arg3[%c0_40, %c0_41] : memref<2x128xf32, #tpu.memory_space<vmem>>, vector<1x128xf32>
    tpu.vector_store %arg3[%c0_40, %c0_41], %116 {strides = array<i32>} : memref<2x128xf32, #tpu.memory_space<vmem>>, vector<1x128xf32>,
    %cst_42 = arith.constant 0.000000e+00 : f32
    %118 = vector.broadcast %cst_42 : f32 to vector<1x128xf32>
    %119 = arith.select %104, %101, %118 : vector<1x128xi1>, vector<1x128xf32>
    %c1_43 = arith.constant 1 : index
    %c0_44 = arith.constant 0 : index
    %120 = vector.load %arg3[%c1_43, %c0_44] : memref<2x128xf32, #tpu.memory_space<vmem>>, vector<1x128xf32>
    tpu.vector_store %arg3[%c1_43, %c0_44], %119 {strides = array<i32>} : memref<2x128xf32, #tpu.memory_space<vmem>>, vector<1x128xf32>,
    return
  }
}

</mosaic_0001>

<llo_original>
// kernel: rubber_bard_lstm_forward.1
$region0: #{rubber_bard_lstm_forward.1}
  #allocation0 [shape = 'u32[]', space=smem, size = 0x4, offset = 0x4, fixed_abs, tag = 'smem constant byte address 0x4 - core index']
  #allocation1 [shape = 'u32[144,128]{1,0:T(1,128)}', space=vmem, size = 0x12000, scoped, tag = 'internal scratch']
  #allocation2 [shape = 's32[1]{0}', space=sflag, size = 0x4, scoped, tag = 'scoped memory for rubber_bard_lstm_forward.1']
  #allocation3 [shape = 'u8[512]{0}', space=smem, size = 0x200, scoped, tag = 'prefetched SMEM operand 0']
  %s0 = inlined_call_operand.vmem [shape: s32[8], index: 0, kind: input, shape index: {}]
  %s1 = inlined_call_operand.vmem [shape: f32[256,32], index: 1, kind: input, shape index: {}]
  %s2 = inlined_call_operand.vmem [shape: bf16[528,128], index: 2, kind: input, shape index: {}]
  %s3 = inlined_call_operand.vmem [shape: f32[2,128], index: 3, kind: output, shape index: {}]
  %s4 = sld [smem:[#allocation0]]
  $region18: #{rubber_bard_lstm_forward.1} parent=0
    _
  %s6 = ssub.s32 1, %s4
  %s7 = scalar_select 0, %s6, %s4
  %s8 = sshll.u32 %s0, 4
  %s9 = int_to_ptr.vmem [resolvable:$true] %s8
  %11 = dma.vmem_to_smem %s9, 16, [#allocation3], [#allocation2]
  %12 = dma.done [#allocation2], 16
  %13 = sfence
  // Predicated region
  $region2: #{rubber_bard_lstm_forward.1} parent=0 // pred_check
    _
  $region3: #{rubber_bard_lstm_forward.1} parent=0 // pred_check_branch
    %15 = sbr.rel (0) target = $region5
  $region4: #{rubber_bard_lstm_forward.1} parent=0 // pred_region
    _
  $region5: #{rubber_bard_lstm_forward.1} parent=0 // pred_fallthru
    _
  // Predicated region
  $region6: #{rubber_bard_lstm_forward.1} parent=0 // pred_check
    _
  $region7: #{rubber_bard_lstm_forward.1} parent=0 // pred_check_branch
    %17 = sbr.rel (0) target = $region9
  $region8: #{rubber_bard_lstm_forward.1} parent=0 // pred_region
    _
  $region9: #{rubber_bard_lstm_forward.1} parent=0 // pred_fallthru
    _
  %v19 = vld [vmem:[%s2 + $0x100] sm:$0x3]
  %v20 = vunpack.c.l.bf16 %v19
  %s21 = sld [smem:[#allocation3]]
  %s22 = scalar_lea.vmem %s1, %s21
  %v23 = vld [vmem:[%s22] sm:$0x1]
  %v24 = vpack.c.bf16 %v23, %v23
  %v25 = vld [vmem:[%s2] sm:$0xf]
  %v26 = vld [vmem:[%s2 + $0x4] sm:$0xf]
  %v27 = vld [vmem:[%s2 + $0x8] sm:$0xf]
  %v28 = vld [vmem:[%s2 + $0xc] sm:$0xf]
  %s29 = sld [smem:[#allocation3 + $0x1]]
  %s30 = scalar_lea.vmem %s1, %s29
  %v31 = vld [vmem:[%s30] sm:$0x1]
  %v32 = vpack.c.bf16 %v31, %v31
  %v33 = vld [vmem:[%s2 + $0x10] sm:$0xf]
  %v34 = vld [vmem:[%s2 + $0x14] sm:$0xf]
  %v35 = vld [vmem:[%s2 + $0x18] sm:$0xf]
  %v36 = vld [vmem:[%s2 + $0x1c] sm:$0xf]
  %v41 = vunpack.c.l.b16 %v33
  %v42 = vunpack.c.l.b16 %v34
  %v43 = vunpack.c.l.b16 %v35
  %v44 = vunpack.c.l.b16 %v36
  %v45 = vpack.c.b16 %v42, %v41
  %v46 = vpack.c.b16 %v44, %v43
  %vm49 = vcmask 261120
  %v51 = vsel %vm49, %v32, 0
  %53 = vmatprep.subr.bf16.mxu0 0
  %54 = vmatpush1.bf16.msra.mxu0 0
  %55 = vmatprep.subr.bf16.mxu0 0
  %56 = vmatpush1.bf16.msra.mxu0 0
  %57 = vmatprep.subr.bf16.mxu0 0
  %58 = vmatpush1.bf16.msra.mxu0 0
  %59 = vmatprep.subr.bf16.mxu0 0
  %60 = vmatpush1.bf16.msra.mxu0 0
  %61 = vmatprep.subr.bf16.mxu0 0
  %62 = vmatpush1.bf16.msra.mxu0 0
  %63 = vmatprep.subr.bf16.mxu0 0
  %64 = vmatpush1.bf16.msra.mxu0 0
  %65 = vmatprep.subr.bf16.mxu0 0
  %66 = vmatpush1.bf16.msra.mxu0 %v46
  %67 = vmatprep.subr.bf16.mxu0 0
  %68 = vmatpush1.bf16.msra.mxu0 %v45
  %69 = vmatprep.subr.bf16.mxu0 0
  %70 = vmatpush2.bf16.msra.mxu0 0
  %71 = vmatprep.subr.bf16.mxu0 0
  %72 = vmatpush2.bf16.msra.mxu0 0
  %73 = vmatprep.subr.bf16.mxu0 0
  %74 = vmatpush2.bf16.msra.mxu0 0
  %75 = vmatprep.subr.bf16.mxu0 0
  %76 = vmatpush2.bf16.msra.mxu0 0
  %77 = vmatprep.subr.bf16.mxu0 0
  %78 = vmatpush2.bf16.msra.mxu0 0
  %79 = vmatprep.subr.bf16.mxu0 0
  %80 = vmatpush2.bf16.msra.mxu0 0
  %81 = vmatprep.subr.bf16.mxu0 0
  %82 = vmatpush2.bf16.msra.mxu0 0
  %83 = vmatprep.subr.bf16.mxu0 0
  %84 = vmatpush2.bf16.msra.mxu0 0
  %85 = vmatprep.mubr.bf16.mxu0 0
  %86 = vmatmul.mubr.bf16.gmra.mxu0 %v51
  %v87 = vpop.f32.mrf.mxu0
  %v88 = vadd.f32 0.0, %v87
  %v89 = vpop.f32.mrf.mxu0
  %v90 = vpop.f32.mrf.mxu0
  %v91 = vpop.f32.mrf.mxu0
  %92 = vdwg.mxu0
  %s93 = sld [smem:[#allocation3 + $0x2]]
  %s94 = scalar_lea.vmem %s1, %s93
  %v95 = vld [vmem:[%s94] sm:$0x1]
  %v96 = vpack.c.bf16 %v95, %v95
  %v97 = vld [vmem:[%s2 + $0x20] sm:$0xf]
  %v98 = vld [vmem:[%s2 + $0x24] sm:$0xf]
  %v99 = vld [vmem:[%s2 + $0x28] sm:$0xf]
  %v100 = vld [vmem:[%s2 + $0x2c] sm:$0xf]
  %s101 = sld [smem:[#allocation3 + $0x3]]
  %s102 = scalar_lea.vmem %s1, %s101
  %v103 = vld [vmem:[%s102] sm:$0x1]
  %v104 = vpack.c.bf16 %v103, %v103
  %v105 = vld [vmem:[%s2 + $0x30] sm:$0xf]
  %v106 = vld [vmem:[%s2 + $0x34] sm:$0xf]
  %v107 = vld [vmem:[%s2 + $0x38] sm:$0xf]
  %v108 = vld [vmem:[%s2 + $0x3c] sm:$0xf]
  %v113 = vunpack.c.l.b16 %v105
  %v114 = vunpack.c.l.b16 %v106
  %v115 = vunpack.c.l.b16 %v107
  %v116 = vunpack.c.l.b16 %v108
  %v117 = vpack.c.b16 %v114, %v113
  %v118 = vpack.c.b16 %v116, %v115
  %v122 = vsel %vm49, %v104, 0
  %124 = vmatprep.subr.bf16.mxu0 0
  %125 = vmatpush1.bf16.msra.mxu0 0
  %126 = vmatprep.subr.bf16.mxu0 0
  %127 = vmatpush1.bf16.msra.mxu0 0
  %128 = vmatprep.subr.bf16.mxu0 0
  %129 = vmatpush1.bf16.msra.mxu0 0
  %130 = vmatprep.subr.bf16.mxu0 0
  %131 = vmatpush1.bf16.msra.mxu0 0
  %132 = vmatprep.subr.bf16.mxu0 0
  %133 = vmatpush1.bf16.msra.mxu0 0
  %134 = vmatprep.subr.bf16.mxu0 0
  %135 = vmatpush1.bf16.msra.mxu0 0
  %136 = vmatprep.subr.bf16.mxu0 0
  %137 = vmatpush1.bf16.msra.mxu0 %v118
  %138 = vmatprep.subr.bf16.mxu0 0
  %139 = vmatpush1.bf16.msra.mxu0 %v117
  %140 = vmatprep.subr.bf16.mxu0 0
  %141 = vmatpush2.bf16.msra.mxu0 0
  %142 = vmatprep.subr.bf16.mxu0 0
  %143 = vmatpush2.bf16.msra.mxu0 0
  %144 = vmatprep.subr.bf16.mxu0 0
  %145 = vmatpush2.bf16.msra.mxu0 0
  %146 = vmatprep.subr.bf16.mxu0 0
  %147 = vmatpush2.bf16.msra.mxu0 0
  %148 = vmatprep.subr.bf16.mxu0 0
  %149 = vmatpush2.bf16.msra.mxu0 0
  %150 = vmatprep.subr.bf16.mxu0 0
  %151 = vmatpush2.bf16.msra.mxu0 0
  %152 = vmatprep.subr.bf16.mxu0 0
  %153 = vmatpush2.bf16.msra.mxu0 0
  %154 = vmatprep.subr.bf16.mxu0 0
  %155 = vmatpush2.bf16.msra.mxu0 0
  %156 = vmatprep.mubr.bf16.mxu0 0
  %157 = vmatmul.mubr.bf16.gmra.mxu0 %v122
  %v158 = vpop.f32.mrf.mxu0
  %v159 = vadd.f32 0.0, %v158
  %v160 = vpop.f32.mrf.mxu0
  %v161 = vpop.f32.mrf.mxu0
  %v162 = vpop.f32.mrf.mxu0
  %163 = vdwg.mxu0
  %s164 = sld [smem:[#allocation3 + $0x4]]
  %s165 = scalar_lea.vmem %s1, %s164
  %v166 = vld [vmem:[%s165] sm:$0x1]
  %v167 = vpack.c.bf16 %v166, %v166
  %v168 = vld [vmem:[%s2 + $0x40] sm:$0xf]
  %v169 = vld [vmem:[%s2 + $0x44] sm:$0xf]
  %v170 = vld [vmem:[%s2 + $0x48] sm:$0xf]
  %v171 = vld [vmem:[%s2 + $0x4c] sm:$0xf]
  %s172 = sld [smem:[#allocation3 + $0x5]]
  %s173 = scalar_lea.vmem %s1, %s172
  %v174 = vld [vmem:[%s173] sm:$0x1]
  %v175 = vpack.c.bf16 %v174, %v174
  %v176 = vld [vmem:[%s2 + $0x50] sm:$0xf]
  %v177 = vld [vmem:[%s2 + $0x54] sm:$0xf]
  %v178 = vld [vmem:[%s2 + $0x58] sm:$0xf]
  %v179 = vld [vmem:[%s2 + $0x5c] sm:$0xf]
  %v184 = vunpack.c.l.b16 %v176
  %v185 = vunpack.c.l.b16 %v177
  %v186 = vunpack.c.l.b16 %v178
  %v187 = vunpack.c.l.b16 %v179
  %v188 = vpack.c.b16 %v185, %v184
  %v189 = vpack.c.b16 %v187, %v186
  %v193 = vsel %vm49, %v175, 0
  %195 = vmatprep.subr.bf16.mxu0 0
  %196 = vmatpush1.bf16.msra.mxu0 0
  %197 = vmatprep.subr.bf16.mxu0 0
  %198 = vmatpush1.bf16.msra.mxu0 0
  %199 = vmatprep.subr.bf16.mxu0 0
  %200 = vmatpush1.bf16.msra.mxu0 0
  %201 = vmatprep.subr.bf16.mxu0 0
  %202 = vmatpush1.bf16.msra.mxu0 0
  %203 = vmatprep.subr.bf16.mxu0 0
  %204 = vmatpush1.bf16.msra.mxu0 0
  %205 = vmatprep.subr.bf16.mxu0 0
  %206 = vmatpush1.bf16.msra.mxu0 0
  %207 = vmatprep.subr.bf16.mxu0 0
  %208 = vmatpush1.bf16.msra.mxu0 %v189
  %209 = vmatprep.subr.bf16.mxu0 0
  %210 = vmatpush1.bf16.msra.mxu0 %v188
  %211 = vmatprep.subr.bf16.mxu0 0
  %212 = vmatpush2.bf16.msra.mxu0 0
  %213 = vmatprep.subr.bf16.mxu0 0
  %214 = vmatpush2.bf16.msra.mxu0 0
  %215 = vmatprep.subr.bf16.mxu0 0
  %216 = vmatpush2.bf16.msra.mxu0 0
  %217 = vmatprep.subr.bf16.mxu0 0
  %218 = vmatpush2.bf16.msra.mxu0 0
  %219 = vmatprep.subr.bf16.mxu0 0
  %220 = vmatpush2.bf16.msra.mxu0 0
  %221 = vmatprep.subr.bf16.mxu0 0
  %222 = vmatpush2.bf16.msra.mxu0 0
  %223 = vmatprep.subr.bf16.mxu0 0
  %224 = vmatpush2.bf16.msra.mxu0 0
  %225 = vmatprep.subr.bf16.mxu0 0
  %226 = vmatpush2.bf16.msra.mxu0 0
  %227 = vmatprep.mubr.bf16.mxu0 0
  %228 = vmatmul.mubr.bf16.gmra.mxu0 %v193
  %v229 = vpop.f32.mrf.mxu0
  %v230 = vadd.f32 0.0, %v229
  %v231 = vpop.f32.mrf.mxu0
  %v232 = vpop.f32.mrf.mxu0
  %v233 = vpop.f32.mrf.mxu0
  %234 = vdwg.mxu0
  %s235 = sld [smem:[#allocation3 + $0x6]]
  %s236 = scalar_lea.vmem %s1, %s235
  %v237 = vld [vmem:[%s236] sm:$0x1]
  %v238 = vpack.c.bf16 %v237, %v237
  %v239 = vld [vmem:[%s2 + $0x60] sm:$0xf]
  %v240 = vld [vmem:[%s2 + $0x64] sm:$0xf]
  %v241 = vld [vmem:[%s2 + $0x68] sm:$0xf]
  %v242 = vld [vmem:[%s2 + $0x6c] sm:$0xf]
  %s243 = sld [smem:[#allocation3 + $0x7]]
  %s244 = scalar_lea.vmem %s1, %s243
  %v245 = vld [vmem:[%s244] sm:$0x1]
  %v246 = vpack.c.bf16 %v245, %v245
  %v247 = vld [vmem:[%s2 + $0x70] sm:$0xf]
  %v248 = vld [vmem:[%s2 + $0x74] sm:$0xf]
  %v249 = vld [vmem:[%s2 + $0x78] sm:$0xf]
  %v250 = vld [vmem:[%s2 + $0x7c] sm:$0xf]
  %v255 = vunpack.c.l.b16 %v247
  %v256 = vunpack.c.l.b16 %v248
  %v257 = vunpack.c.l.b16 %v249
  %v258 = vunpack.c.l.b16 %v250
  %v259 = vpack.c.b16 %v256, %v255
  %v260 = vpack.c.b16 %v258, %v257
  %v264 = vsel %vm49, %v246, 0
  %266 = vmatprep.subr.bf16.mxu0 0
  %267 = vmatpush1.bf16.msra.mxu0 0
  %268 = vmatprep.subr.bf16.mxu0 0
  %269 = vmatpush1.bf16.msra.mxu0 0
  %270 = vmatprep.subr.bf16.mxu0 0
  %271 = vmatpush1.bf16.msra.mxu0 0
  %272 = vmatprep.subr.bf16.mxu0 0
  %273 = vmatpush1.bf16.msra.mxu0 0
  %274 = vmatprep.subr.bf16.mxu0 0
  %275 = vmatpush1.bf16.msra.mxu0 0
  %276 = vmatprep.subr.bf16.mxu0 0
  %277 = vmatpush1.bf16.msra.mxu0 0
  %278 = vmatprep.subr.bf16.mxu0 0
  %279 = vmatpush1.bf16.msra.mxu0 %v260
  %280 = vmatprep.subr.bf16.mxu0 0
  %281 = vmatpush1.bf16.msra.mxu0 %v259
  %282 = vmatprep.subr.bf16.mxu0 0
  %283 = vmatpush2.bf16.msra.mxu0 0
  %284 = vmatprep.subr.bf16.mxu0 0
  %285 = vmatpush2.bf16.msra.mxu0 0
  %286 = vmatprep.subr.bf16.mxu0 0
  %287 = vmatpush2.bf16.msra.mxu0 0
  %288 = vmatprep.subr.bf16.mxu0 0
  %289 = vmatpush2.bf16.msra.mxu0 0
  %290 = vmatprep.subr.bf16.mxu0 0
  %291 = vmatpush2.bf16.msra.mxu0 0
  %292 = vmatprep.subr.bf16.mxu0 0
  %293 = vmatpush2.bf16.msra.mxu0 0
  %294 = vmatprep.subr.bf16.mxu0 0
  %295 = vmatpush2.bf16.msra.mxu0 0
  %296 = vmatprep.subr.bf16.mxu0 0
  %297 = vmatpush2.bf16.msra.mxu0 0
  %298 = vmatprep.mubr.bf16.mxu0 0
  %299 = vmatmul.mubr.bf16.gmra.mxu0 %v264
  %v300 = vpop.f32.mrf.mxu0
  %v301 = vadd.f32 0.0, %v300
  %v302 = vpop.f32.mrf.mxu0
  %v303 = vpop.f32.mrf.mxu0
  %v304 = vpop.f32.mrf.mxu0
  %305 = vdwg.mxu0
  %v310 = vunpack.c.l.b16 %v25
  %v311 = vunpack.c.l.b16 %v26
  %v312 = vunpack.c.l.b16 %v27
  %v313 = vunpack.c.l.b16 %v28
  %v314 = vpack.c.b16 %v311, %v310
  %v315 = vpack.c.b16 %v313, %v312
  %v319 = vsel %vm49, %v24, 0
  %321 = vmatprep.subr.bf16.mxu0 0
  %322 = vmatpush1.bf16.msra.mxu0 0
  %323 = vmatprep.subr.bf16.mxu0 0
  %324 = vmatpush1.bf16.msra.mxu0 0
  %325 = vmatprep.subr.bf16.mxu0 0
  %326 = vmatpush1.bf16.msra.mxu0 0
  %327 = vmatprep.subr.bf16.mxu0 0
  %328 = vmatpush1.bf16.msra.mxu0 0
  %329 = vmatprep.subr.bf16.mxu0 0
  %330 = vmatpush1.bf16.msra.mxu0 0
  %331 = vmatprep.subr.bf16.mxu0 0
  %332 = vmatpush1.bf16.msra.mxu0 0
  %333 = vmatprep.subr.bf16.mxu0 0
  %334 = vmatpush1.bf16.msra.mxu0 %v315
  %335 = vmatprep.subr.bf16.mxu0 0
  %336 = vmatpush1.bf16.msra.mxu0 %v314
  %337 = vmatprep.subr.bf16.mxu0 0
  %338 = vmatpush2.bf16.msra.mxu0 0
  %339 = vmatprep.subr.bf16.mxu0 0
  %340 = vmatpush2.bf16.msra.mxu0 0
  %341 = vmatprep.subr.bf16.mxu0 0
  %342 = vmatpush2.bf16.msra.mxu0 0
  %343 = vmatprep.subr.bf16.mxu0 0
  %344 = vmatpush2.bf16.msra.mxu0 0
  %345 = vmatprep.subr.bf16.mxu0 0
  %346 = vmatpush2.bf16.msra.mxu0 0
  %347 = vmatprep.subr.bf16.mxu0 0
  %348 = vmatpush2.bf16.msra.mxu0 0
  %349 = vmatprep.subr.bf16.mxu0 0
  %350 = vmatpush2.bf16.msra.mxu0 0
  %351 = vmatprep.subr.bf16.mxu0 0
  %352 = vmatpush2.bf16.msra.mxu0 0
  %353 = vmatprep.mubr.bf16.mxu0 0
  %354 = vmatmul.mubr.bf16.gmra.mxu0 %v319
  %v355 = vpop.f32.mrf.mxu0
  %v356 = vadd.f32 %v88, %v355
  %v357 = vpop.f32.mrf.mxu0
  %v358 = vpop.f32.mrf.mxu0
  %v359 = vpop.f32.mrf.mxu0
  %360 = vdwg.mxu0
  %v365 = vunpack.c.l.b16 %v97
  %v366 = vunpack.c.l.b16 %v98
  %v367 = vunpack.c.l.b16 %v99
  %v368 = vunpack.c.l.b16 %v100
  %v369 = vpack.c.b16 %v366, %v365
  %v370 = vpack.c.b16 %v368, %v367
  %v374 = vsel %vm49, %v96, 0
  %376 = vmatprep.subr.bf16.mxu0 0
  %377 = vmatpush1.bf16.msra.mxu0 0
  %378 = vmatprep.subr.bf16.mxu0 0
  %379 = vmatpush1.bf16.msra.mxu0 0
  %380 = vmatprep.subr.bf16.mxu0 0
  %381 = vmatpush1.bf16.msra.mxu0 0
  %382 = vmatprep.subr.bf16.mxu0 0
  %383 = vmatpush1.bf16.msra.mxu0 0
  %384 = vmatprep.subr.bf16.mxu0 0
  %385 = vmatpush1.bf16.msra.mxu0 0
  %386 = vmatprep.subr.bf16.mxu0 0
  %387 = vmatpush1.bf16.msra.mxu0 0
  %388 = vmatprep.subr.bf16.mxu0 0
  %389 = vmatpush1.bf16.msra.mxu0 %v370
  %390 = vmatprep.subr.bf16.mxu0 0
  %391 = vmatpush1.bf16.msra.mxu0 %v369
  %392 = vmatprep.subr.bf16.mxu0 0
  %393 = vmatpush2.bf16.msra.mxu0 0
  %394 = vmatprep.subr.bf16.mxu0 0
  %395 = vmatpush2.bf16.msra.mxu0 0
  %396 = vmatprep.subr.bf16.mxu0 0
  %397 = vmatpush2.bf16.msra.mxu0 0
  %398 = vmatprep.subr.bf16.mxu0 0
  %399 = vmatpush2.bf16.msra.mxu0 0
  %400 = vmatprep.subr.bf16.mxu0 0
  %401 = vmatpush2.bf16.msra.mxu0 0
  %402 = vmatprep.subr.bf16.mxu0 0
  %403 = vmatpush2.bf16.msra.mxu0 0
  %404 = vmatprep.subr.bf16.mxu0 0
  %405 = vmatpush2.bf16.msra.mxu0 0
  %406 = vmatprep.subr.bf16.mxu0 0
  %407 = vmatpush2.bf16.msra.mxu0 0
  %408 = vmatprep.mubr.bf16.mxu0 0
  %409 = vmatmul.mubr.bf16.gmra.mxu0 %v374
  %v410 = vpop.f32.mrf.mxu0
  %v411 = vadd.f32 %v159, %v410
  %v412 = vpop.f32.mrf.mxu0
  %v413 = vpop.f32.mrf.mxu0
  %v414 = vpop.f32.mrf.mxu0
  %415 = vdwg.mxu0
  %v420 = vunpack.c.l.b16 %v168
  %v421 = vunpack.c.l.b16 %v169
  %v422 = vunpack.c.l.b16 %v170
  %v423 = vunpack.c.l.b16 %v171
  %v424 = vpack.c.b16 %v421, %v420
  %v425 = vpack.c.b16 %v423, %v422
  %v429 = vsel %vm49, %v167, 0
  %431 = vmatprep.subr.bf16.mxu0 0
  %432 = vmatpush1.bf16.msra.mxu0 0
  %433 = vmatprep.subr.bf16.mxu0 0
  %434 = vmatpush1.bf16.msra.mxu0 0
  %435 = vmatprep.subr.bf16.mxu0 0
  %436 = vmatpush1.bf16.msra.mxu0 0
  %437 = vmatprep.subr.bf16.mxu0 0
  %438 = vmatpush1.bf16.msra.mxu0 0
  %439 = vmatprep.subr.bf16.mxu0 0
  %440 = vmatpush1.bf16.msra.mxu0 0
  %441 = vmatprep.subr.bf16.mxu0 0
  %442 = vmatpush1.bf16.msra.mxu0 0
  %443 = vmatprep.subr.bf16.mxu0 0
  %444 = vmatpush1.bf16.msra.mxu0 %v425
  %445 = vmatprep.subr.bf16.mxu0 0
  %446 = vmatpush1.bf16.msra.mxu0 %v424
  %447 = vmatprep.subr.bf16.mxu0 0
  %448 = vmatpush2.bf16.msra.mxu0 0
  %449 = vmatprep.subr.bf16.mxu0 0
  %450 = vmatpush2.bf16.msra.mxu0 0
  %451 = vmatprep.subr.bf16.mxu0 0
  %452 = vmatpush2.bf16.msra.mxu0 0
  %453 = vmatprep.subr.bf16.mxu0 0
  %454 = vmatpush2.bf16.msra.mxu0 0
  %455 = vmatprep.subr.bf16.mxu0 0
  %456 = vmatpush2.bf16.msra.mxu0 0
  %457 = vmatprep.subr.bf16.mxu0 0
  %458 = vmatpush2.bf16.msra.mxu0 0
  %459 = vmatprep.subr.bf16.mxu0 0
  %460 = vmatpush2.bf16.msra.mxu0 0
  %461 = vmatprep.subr.bf16.mxu0 0
  %462 = vmatpush2.bf16.msra.mxu0 0
  %463 = vmatprep.mubr.bf16.mxu0 0
  %464 = vmatmul.mubr.bf16.gmra.mxu0 %v429
  %v465 = vpop.f32.mrf.mxu0
  %v466 = vadd.f32 %v230, %v465
  %v467 = vpop.f32.mrf.mxu0
  %v468 = vpop.f32.mrf.mxu0
  %v469 = vpop.f32.mrf.mxu0
  %470 = vdwg.mxu0
  %v475 = vunpack.c.l.b16 %v239
  %v476 = vunpack.c.l.b16 %v240
  %v477 = vunpack.c.l.b16 %v241
  %v478 = vunpack.c.l.b16 %v242
  %v479 = vpack.c.b16 %v476, %v475
  %v480 = vpack.c.b16 %v478, %v477
  %v484 = vsel %vm49, %v238, 0
  %486 = vmatprep.subr.bf16.mxu0 0
  %487 = vmatpush1.bf16.msra.mxu0 0
  %488 = vmatprep.subr.bf16.mxu0 0
  %489 = vmatpush1.bf16.msra.mxu0 0
  %490 = vmatprep.subr.bf16.mxu0 0
  %491 = vmatpush1.bf16.msra.mxu0 0
  %492 = vmatprep.subr.bf16.mxu0 0
  %493 = vmatpush1.bf16.msra.mxu0 0
  %494 = vmatprep.subr.bf16.mxu0 0
  %495 = vmatpush1.bf16.msra.mxu0 0
  %496 = vmatprep.subr.bf16.mxu0 0
  %497 = vmatpush1.bf16.msra.mxu0 0
  %498 = vmatprep.subr.bf16.mxu0 0
  %499 = vmatpush1.bf16.msra.mxu0 %v480
  %500 = vmatprep.subr.bf16.mxu0 0
  %501 = vmatpush1.bf16.msra.mxu0 %v479
  %502 = vmatprep.subr.bf16.mxu0 0
  %503 = vmatpush2.bf16.msra.mxu0 0
  %504 = vmatprep.subr.bf16.mxu0 0
  %505 = vmatpush2.bf16.msra.mxu0 0
  %506 = vmatprep.subr.bf16.mxu0 0
  %507 = vmatpush2.bf16.msra.mxu0 0
  %508 = vmatprep.subr.bf16.mxu0 0
  %509 = vmatpush2.bf16.msra.mxu0 0
  %510 = vmatprep.subr.bf16.mxu0 0
  %511 = vmatpush2.bf16.msra.mxu0 0
  %512 = vmatprep.subr.bf16.mxu0 0
  %513 = vmatpush2.bf16.msra.mxu0 0
  %514 = vmatprep.subr.bf16.mxu0 0
  %515 = vmatpush2.bf16.msra.mxu0 0
  %516 = vmatprep.subr.bf16.mxu0 0
  %517 = vmatpush2.bf16.msra.mxu0 0
  %518 = vmatprep.mubr.bf16.mxu0 0
  %519 = vmatmul.mubr.bf16.gmra.mxu0 %v484
  %v520 = vpop.f32.mrf.mxu0
  %v521 = vadd.f32 %v301, %v520
  %v522 = vpop.f32.mrf.mxu0
  %v523 = vpop.f32.mrf.mxu0
  %v524 = vpop.f32.mrf.mxu0
  %525 = vdwg.mxu0
  %v526 = vadd.f32 %v356, %v411
  %v527 = vadd.f32 %v466, %v521
  %v528 = vadd.f32 %v526, %v527
  %v529 = vadd.f32 %v528, %v20
  %v530 = vxor.u32 %v529, 2147483648
  %v531 = vmul.f32 %v530, 1.442695
  %v532 = vpow.pop %v531
  %v533 = vadd.f32 %v532, 1.0
  %v534 = vrcp.pop %v533
  %v535 = vmul.f32 1.0, %v534
  %v536 = vtanh.pop %v529
  %537 = vrot.lane.b32.xlu0 %v536, 64
  %v538 = vpop.permute.xlu0 %537
  %v539 = vmul.f32 %v535, %v538
  %v540 = vtanh.pop %v539
  %541 = vrot.lane.b32.xlu0 %v535, 32
  %v542 = vpop.permute.xlu0 %541
  %v543 = vmul.f32 %v542, %v540
  %v544 = vpack.c.bf16 %v543, %v543
  %v545 = vld [vmem:[%s2 + $0x80] sm:$0xf]
  %v546 = vld [vmem:[%s2 + $0x84] sm:$0xf]
  %v547 = vld [vmem:[%s2 + $0x88] sm:$0xf]
  %v548 = vld [vmem:[%s2 + $0x8c] sm:$0xf]
  %v549 = vld [vmem:[%s2 + $0x90] sm:$0xf]
  %v550 = vld [vmem:[%s2 + $0x94] sm:$0xf]
  %v551 = vld [vmem:[%s2 + $0x98] sm:$0xf]
  %v552 = vld [vmem:[%s2 + $0x9c] sm:$0xf]
  %v553 = vld [vmem:[%s2 + $0xa0] sm:$0xf]
  %v554 = vld [vmem:[%s2 + $0xa4] sm:$0xf]
  %v555 = vld [vmem:[%s2 + $0xa8] sm:$0xf]
  %v556 = vld [vmem:[%s2 + $0xac] sm:$0xf]
  %v557 = vld [vmem:[%s2 + $0xb0] sm:$0xf]
  %v558 = vld [vmem:[%s2 + $0xb4] sm:$0xf]
  %v559 = vld [vmem:[%s2 + $0xb8] sm:$0xf]
  %v560 = vld [vmem:[%s2 + $0xbc] sm:$0xf]
  %v577 = vunpack.c.l.b16 %v545
  %v578 = vunpack.c.l.b16 %v546
  %v579 = vunpack.c.l.b16 %v547
  %v580 = vunpack.c.l.b16 %v548
  %v581 = vunpack.c.l.b16 %v549
  %v582 = vunpack.c.l.b16 %v550
  %v583 = vunpack.c.l.b16 %v551
  %v584 = vunpack.c.l.b16 %v552
  %v585 = vunpack.c.l.b16 %v553
  %v586 = vunpack.c.l.b16 %v554
  %v587 = vunpack.c.l.b16 %v555
  %v588 = vunpack.c.l.b16 %v556
  %v589 = vunpack.c.l.b16 %v557
  %v590 = vunpack.c.l.b16 %v558
  %v591 = vunpack.c.l.b16 %v559
  %v592 = vunpack.c.l.b16 %v560
  %v593 = vpack.c.b16 %v578, %v577
  %v594 = vpack.c.b16 %v580, %v579
  %v595 = vpack.c.b16 %v582, %v581
  %v596 = vpack.c.b16 %v584, %v583
  %v597 = vpack.c.b16 %v586, %v585
  %v598 = vpack.c.b16 %v588, %v587
  %v599 = vpack.c.b16 %v590, %v589
  %v600 = vpack.c.b16 %v592, %v591
  %v610 = vrot.slane %v20, 1
  %612 = vmatprep.subr.bf16.mxu0 0
  %613 = vmatpush1.bf16.msra.mxu0 %v600
  %614 = vmatprep.subr.bf16.mxu0 0
  %615 = vmatpush1.bf16.msra.mxu0 %v599
  %616 = vmatprep.subr.bf16.mxu0 0
  %617 = vmatpush1.bf16.msra.mxu0 %v598
  %618 = vmatprep.subr.bf16.mxu0 0
  %619 = vmatpush1.bf16.msra.mxu0 %v597
  %620 = vmatprep.subr.bf16.mxu0 0
  %621 = vmatpush1.bf16.msra.mxu0 %v596
  %622 = vmatprep.subr.bf16.mxu0 0
  %623 = vmatpush1.bf16.msra.mxu0 %v595
  %624 = vmatprep.subr.bf16.mxu0 0
  %625 = vmatpush1.bf16.msra.mxu0 %v594
  %626 = vmatprep.subr.bf16.mxu0 0
  %627 = vmatpush1.bf16.msra.mxu0 %v593
  %628 = vmatprep.subr.bf16.mxu0 0
  %629 = vmatpush2.bf16.msra.mxu0 0
  %630 = vmatprep.subr.bf16.mxu0 0
  %631 = vmatpush2.bf16.msra.mxu0 0
  %632 = vmatprep.subr.bf16.mxu0 0
  %633 = vmatpush2.bf16.msra.mxu0 0
  %634 = vmatprep.subr.bf16.mxu0 0
  %635 = vmatpush2.bf16.msra.mxu0 0
  %636 = vmatprep.subr.bf16.mxu0 0
  %637 = vmatpush2.bf16.msra.mxu0 0
  %638 = vmatprep.subr.bf16.mxu0 0
  %639 = vmatpush2.bf16.msra.mxu0 0
  %640 = vmatprep.subr.bf16.mxu0 0
  %641 = vmatpush2.bf16.msra.mxu0 0
  %642 = vmatprep.subr.bf16.mxu0 0
  %643 = vmatpush2.bf16.msra.mxu0 0
  %644 = vmatprep.mubr.bf16.mxu0 0
  %645 = vmatmul.mubr.bf16.gmra.mxu0 %v544
  %v646 = vpop.f32.mrf.mxu0
  %v647 = vadd.f32 %v610, %v646
  %v648 = vpop.f32.mrf.mxu0
  %v649 = vpop.f32.mrf.mxu0
  %v650 = vpop.f32.mrf.mxu0
  %651 = vdwg.mxu0
  %v652 = vxor.u32 %v647, 2147483648
  %v653 = vmul.f32 %v652, 1.442695
  %v654 = vpow.pop %v653
  %v655 = vadd.f32 %v654, 1.0
  %v656 = vrcp.pop %v655
  %v657 = vmul.f32 1.0, %v656
  %v658 = vtanh.pop %v647
  %659 = vrot.lane.b32.xlu0 %v658, 64
  %v660 = vpop.permute.xlu0 %659
  %v661 = vmul.f32 %v657, %v660
  %v662 = vtanh.pop %v661
  %663 = vrot.lane.b32.xlu0 %v657, 32
  %v664 = vpop.permute.xlu0 %663
  %v665 = vmul.f32 %v664, %v662
  %v666 = vpack.c.bf16 %v665, %v665
  %v667 = vld [vmem:[%s2 + $0xc0] sm:$0xf]
  %v668 = vld [vmem:[%s2 + $0xc4] sm:$0xf]
  %v669 = vld [vmem:[%s2 + $0xc8] sm:$0xf]
  %v670 = vld [vmem:[%s2 + $0xcc] sm:$0xf]
  %v671 = vld [vmem:[%s2 + $0xd0] sm:$0xf]
  %v672 = vld [vmem:[%s2 + $0xd4] sm:$0xf]
  %v673 = vld [vmem:[%s2 + $0xd8] sm:$0xf]
  %v674 = vld [vmem:[%s2 + $0xdc] sm:$0xf]
  %v675 = vld [vmem:[%s2 + $0xe0] sm:$0xf]
  %v676 = vld [vmem:[%s2 + $0xe4] sm:$0xf]
  %v677 = vld [vmem:[%s2 + $0xe8] sm:$0xf]
  %v678 = vld [vmem:[%s2 + $0xec] sm:$0xf]
  %v679 = vld [vmem:[%s2 + $0xf0] sm:$0xf]
  %v680 = vld [vmem:[%s2 + $0xf4] sm:$0xf]
  %v681 = vld [vmem:[%s2 + $0xf8] sm:$0xf]
  %v682 = vld [vmem:[%s2 + $0xfc] sm:$0xf]
  %v699 = vunpack.c.l.b16 %v667
  %v700 = vunpack.c.l.b16 %v668
  %v701 = vunpack.c.l.b16 %v669
  %v702 = vunpack.c.l.b16 %v670
  %v703 = vunpack.c.l.b16 %v671
  %v704 = vunpack.c.l.b16 %v672
  %v705 = vunpack.c.l.b16 %v673
  %v706 = vunpack.c.l.b16 %v674
  %v707 = vunpack.c.l.b16 %v675
  %v708 = vunpack.c.l.b16 %v676
  %v709 = vunpack.c.l.b16 %v677
  %v710 = vunpack.c.l.b16 %v678
  %v711 = vunpack.c.l.b16 %v679
  %v712 = vunpack.c.l.b16 %v680
  %v713 = vunpack.c.l.b16 %v681
  %v714 = vunpack.c.l.b16 %v682
  %v715 = vpack.c.b16 %v700, %v699
  %v716 = vpack.c.b16 %v702, %v701
  %v717 = vpack.c.b16 %v704, %v703
  %v718 = vpack.c.b16 %v706, %v705
  %v719 = vpack.c.b16 %v708, %v707
  %v720 = vpack.c.b16 %v710, %v709
  %v721 = vpack.c.b16 %v712, %v711
  %v722 = vpack.c.b16 %v714, %v713
  %v731 = vrot.slane %v20, 2
  %733 = vmatprep.subr.bf16.mxu0 0
  %734 = vmatpush1.bf16.msra.mxu0 %v722
  %735 = vmatprep.subr.bf16.mxu0 0
  %736 = vmatpush1.bf16.msra.mxu0 %v721
  %737 = vmatprep.subr.bf16.mxu0 0
  %738 = vmatpush1.bf16.msra.mxu0 %v720
  %739 = vmatprep.subr.bf16.mxu0 0
  %740 = vmatpush1.bf16.msra.mxu0 %v719
  %741 = vmatprep.subr.bf16.mxu0 0
  %742 = vmatpush1.bf16.msra.mxu0 %v718
  %743 = vmatprep.subr.bf16.mxu0 0
  %744 = vmatpush1.bf16.msra.mxu0 %v717
  %745 = vmatprep.subr.bf16.mxu0 0
  %746 = vmatpush1.bf16.msra.mxu0 %v716
  %747 = vmatprep.subr.bf16.mxu0 0
  %748 = vmatpush1.bf16.msra.mxu0 %v715
  %749 = vmatprep.subr.bf16.mxu0 0
  %750 = vmatpush2.bf16.msra.mxu0 0
  %751 = vmatprep.subr.bf16.mxu0 0
  %752 = vmatpush2.bf16.msra.mxu0 0
  %753 = vmatprep.subr.bf16.mxu0 0
  %754 = vmatpush2.bf16.msra.mxu0 0
  %755 = vmatprep.subr.bf16.mxu0 0
  %756 = vmatpush2.bf16.msra.mxu0 0
  %757 = vmatprep.subr.bf16.mxu0 0
  %758 = vmatpush2.bf16.msra.mxu0 0
  %759 = vmatprep.subr.bf16.mxu0 0
  %760 = vmatpush2.bf16.msra.mxu0 0
  %761 = vmatprep.subr.bf16.mxu0 0
  %762 = vmatpush2.bf16.msra.mxu0 0
  %763 = vmatprep.subr.bf16.mxu0 0
  %764 = vmatpush2.bf16.msra.mxu0 0
  %765 = vmatprep.mubr.bf16.mxu0 0
  %766 = vmatmul.mubr.bf16.gmra.mxu0 %v666
  %v767 = vpop.f32.mrf.mxu0
  %v768 = vadd.f32 %v731, %v767
  %v769 = vpop.f32.mrf.mxu0
  %v770 = vpop.f32.mrf.mxu0
  %v771 = vpop.f32.mrf.mxu0
  %772 = vdwg.mxu0
  %v773 = vxor.u32 %v768, 2147483648
  %v774 = vmul.f32 %v773, 1.442695
  %v775 = vpow.pop %v774
  %v776 = vadd.f32 %v775, 1.0
  %v777 = vrcp.pop %v776
  %v778 = vmul.f32 1.0, %v777
  %v779 = vtanh.pop %v768
  %780 = vrot.lane.b32.xlu0 %v779, 64
  %v781 = vpop.permute.xlu0 %780
  %v782 = vmul.f32 %v778, %v781
  %v783 = vtanh.pop %v782
  %784 = vrot.lane.b32.xlu0 %v778, 32
  %v785 = vpop.permute.xlu0 %784
  %v786 = vmul.f32 %v785, %v783
  %v787 = vlaneseq
  %v788 = vand.u32 %v787, 127
  %vm789 = vcmp.lt.s32.totalorder %v788, 32
  %v790 = vsel %vm789, %v786, -1e+30
  %vm791 = vcmask 1040384
  %v792 = vsel %vm791, %v790, -inf
  %793 = vmax.xlane.f32.xlu0 %v792
  %v794 = vpop.xlane.xlu0 %793
  %v795 = vsub.f32 %v790, %v794
  %v796 = vmul.f32 %v795, 1.442695
  %v797 = vpow.pop %v796
  %v798 = vsel %vm791, %v797, 0.0
  %799 = vadd.xlane.f32.xlu0 %v798
  %v800 = vpop.xlane.xlu0 %799
  %v801 = vlog2.pop %v800
  %v802 = vmul.f32 %v801, 0.6931472
  %v803 = vsub.f32 %v795, %v802
  %804 = vst [vmem:[%s3] sm:$0x1] %v803
  %v805 = vsel %vm789, %v786, 0.0
  %806 = vst [vmem:[%s3 + $0x1] sm:$0x1] %v805
  // Predicated region
  $region10: #{rubber_bard_lstm_forward.1} parent=0 // pred_check
    _
  $region11: #{rubber_bard_lstm_forward.1} parent=0 // pred_check_branch
    %808 = sbr.rel (0) target = $region13
  $region12: #{rubber_bard_lstm_forward.1} parent=0 // pred_region
    _
  $region13: #{rubber_bard_lstm_forward.1} parent=0 // pred_fallthru
    _
  // Predicated region
  $region14: #{rubber_bard_lstm_forward.1} parent=0 // pred_check
    _
  $region15: #{rubber_bard_lstm_forward.1} parent=0 // pred_check_branch
    %810 = sbr.rel (0) target = $region17
  $region16: #{rubber_bard_lstm_forward.1} parent=0 // pred_region
    _
  $region17: #{rubber_bard_lstm_forward.1} parent=0 // pred_fallthru
    _

</llo_original>
